<compile_context>
chip_gen: v6e
topology: v6e:2x2x1
jax: 0.10.0
libtpu: 0.0.40
codegen_flags: <defaults>
</compile_context>

<pallas_src>
import functools

import jax
import jax.numpy as jnp
from jax.experimental import pallas as pl
from jax.experimental.pallas import tpu as pltpu


def _head_kernel(feat_ref, w1_ref, b1_ref, w2_ref, b2_ref, out_ref, acc_ref,
                 *, seq_len, seq_tile, use_mxu_reduce):
    # feat_ref: (TB, TS, H)   w1_ref: (H, H)   b1_ref: (1, H)
    # w2_ref:   (H, L)        b2_ref: (1, L)   out_ref: (TB, L)
    # acc_ref:  (TB, H) f32   -- running sum over the sequence axis
    s = pl.program_id(1)
    ns = pl.num_programs(1)

    @pl.when(s == 0)
    def _init():
        acc_ref[...] = jnp.zeros_like(acc_ref)

    def _full_tile_accumulate():
        feat = feat_ref[...]                               # native dtype tile
        if use_mxu_reduce:
            # Sequence reduce on the MXU: (TB,1,TS) @ (TB,TS,H) -> (TB,1,H),
            # f32 accumulation. Keeps the VPU/XLU out of the hot loop.
            ones = jnp.ones((feat.shape[0], 1, feat.shape[1]), dtype=feat.dtype)
            partial = jnp.einsum('bqs,bsh->bqh', ones, feat,
                                 preferred_element_type=jnp.float32)[:, 0, :]
        else:
            partial = jnp.sum(feat, axis=1, dtype=jnp.float32)
        acc_ref[...] += partial

    has_tail = (seq_len % seq_tile) != 0
    if has_tail:
        # Full tiles: mask-free accumulate (steady state of the stream).
        @pl.when(s < ns - 1)
        def _steady():
            _full_tile_accumulate()

        # Ragged last tile only: mask padded rows so they do not pollute the sum.
        @pl.when(s == ns - 1)
        def _tail():
            feat = feat_ref[...]
            pos = s * seq_tile + jax.lax.broadcasted_iota(
                jnp.int32, (1, seq_tile, 1), 1)
            feat = jnp.where(pos < seq_len, feat, jnp.zeros_like(feat))
            acc_ref[...] += jnp.sum(feat, axis=1, dtype=jnp.float32)
    else:
        _full_tile_accumulate()

    @pl.when(s == ns - 1)
    def _finalize():
        # mean over the sequence axis
        x = acc_ref[...] * jnp.float32(1.0 / seq_len)      # (TB, H) f32

        # dropout == identity (eval mode)
        # dense: MXU operands in the weight dtype, accumulate in f32
        h = jnp.dot(x.astype(w1_ref.dtype), w1_ref[...],
                    preferred_element_type=jnp.float32)    # (TB, H) f32
        h = jnp.tanh(h + b1_ref[...].astype(jnp.float32))

        # dropout == identity (eval mode)
        # out_proj
        o = jnp.dot(h.astype(w2_ref.dtype), w2_ref[...],
                    preferred_element_type=jnp.float32)    # (TB, L) f32
        o = o + b2_ref[...].astype(jnp.float32)

        out_ref[...] = o.astype(out_ref.dtype)


def _round_up(x, m):
    return ((x + m - 1) // m) * m


def t5_avg_pool_head(features, w_dense, b_dense, w_out, b_out):
    """features: (B, S, H); w_dense: (H, H) [in,out]; b_dense: (H,);
    w_out: (H, L) [in,out]; b_out: (L,). Returns (B, L) float32."""
    B, S, H = features.shape
    L = w_out.shape[1]
    itemsize = jnp.dtype(features.dtype).itemsize
    w_itemsize = jnp.dtype(w_dense.dtype).itemsize

    # ---- generation-aware VMEM knobs ---------------------------------------
    try:
        vmem_cap = int(pltpu.get_tpu_info().vmem_capacity_bytes)
    except Exception:  # be robust if the query is unavailable
        vmem_cap = 64 << 20  # conservative: v7x per-core VMEM

    if vmem_cap >= (100 << 20):      # v5e / v6e class (128 MiB VMEM)
        tile_target = 16 << 20       # per streamed feature buffer
        limit_cap = 96 << 20
    else:                            # v7x class (64 MiB VMEM)
        tile_target = 8 << 20
        limit_cap = 52 << 20

    # dtype-aware sublane alignment for the sequence tile
    if itemsize >= 4:
        seq_align = 8
    elif itemsize == 2:
        seq_align = 16
    else:
        seq_align = 32

    # ---- tile selection ----------------------------------------------------
    # Batch tile: guarantee >= 2 batch-grid steps when B >= 16 so the
    # "parallel" axis can be sharded across v7x's two TensorCores.
    if B >= 16:
        TB = min(256, _round_up(-(-B // 2), 8))
    else:
        TB = B
    TB = min(TB, B)
    # Output block (TB, L) must have TB % 8 == 0 unless TB == B.
    min_tb = B if B <= 8 else 8

    def _seq_tile(tb):
        per_seq_row = max(1, tb * H * itemsize)
        ts = max(1, tile_target // per_seq_row)
        ts = min(ts, S)
        if ts < S:
            ts = max(seq_align, (ts // seq_align) * seq_align)
            ts = min(ts, S)
        return ts

    TS = _seq_tile(TB)
    # If even the smallest aligned sequence tile overflows the per-buffer
    # budget (very large H), shrink the batch tile instead of inflating TS.
    while TB > min_tb and TB * TS * H * itemsize > tile_target:
        new_tb = TB // 2
        if new_tb > 8:
            new_tb = _round_up(new_tb, 8)
        TB = max(min_tb, new_tb)
        TS = _seq_tile(TB)

    grid = (pl.cdiv(B, TB), pl.cdiv(S, TS))

    # MXU sequence-reduce only when the tile shapes are MXU/layout friendly;
    # otherwise use the plain VPU f32 sum (also used for the ragged tail).
    use_mxu_reduce = (H % 128 == 0) and (TS % 8 == 0) and (TS >= 8)

    # ---- VMEM budget -------------------------------------------------------
    feat_tile_bytes = TB * TS * H * itemsize
    weight_bytes = (H * H + H * L) * w_itemsize
    misc_bytes = TB * H * 4 + 2 * TB * L * 4 + 2 * (H + L) * 4
    # 2x feature tile for the double-buffered stream; the constant-index
    # weight blocks are budgeted twice as well to stay safe (see TODO above).
    need = 2 * feat_tile_bytes + 2 * weight_bytes + misc_bytes
    vmem_limit = int(min(max(need + (4 << 20), 32 << 20), limit_cap))
    vmem_limit = int(max(vmem_limit, need + (2 << 20)))  # never below actual need

    cost = pl.CostEstimate(
        flops=B * S * H + 2 * B * H * H + 2 * B * H * L,
        transcendentals=B * H,
        bytes_accessed=(B * S * H * itemsize
                        + (H * H + H * L) * w_itemsize
                        + (H + L) * 4
                        + B * L * 4),
    )

    kernel = functools.partial(_head_kernel, seq_len=S, seq_tile=TS,
                               use_mxu_reduce=use_mxu_reduce)

    return pl.pallas_call(
        kernel,
        out_shape=jax.ShapeDtypeStruct((B, L), jnp.float32),
        grid_spec=pltpu.PrefetchScalarGridSpec(
            num_scalar_prefetch=0,
            grid=grid,
            in_specs=[
                # streamed feature tiles (double-buffered by the pipeline)
                pl.BlockSpec((TB, TS, H), lambda b, s: (b, s, 0)),
                # weights / biases: constant block index -> stay resident
                pl.BlockSpec((H, H), lambda b, s: (0, 0)),
                pl.BlockSpec((1, H), lambda b, s: (0, 0)),
                pl.BlockSpec((H, L), lambda b, s: (0, 0)),
                pl.BlockSpec((1, L), lambda b, s: (0, 0)),
            ],
            out_specs=pl.BlockSpec((TB, L), lambda b, s: (b, 0)),
            scratch_shapes=[pltpu.VMEM((TB, H), jnp.float32)],
        ),
        compiler_params=pltpu.CompilerParams(
            dimension_semantics=("parallel", "arbitrary"),
            vmem_limit_bytes=vmem_limit,
        ),
        cost_estimate=cost,
    )(features, w_dense, b_dense.reshape(1, H), w_out, b_out.reshape(1, L))


def reference(features, w_dense, b_dense, w_out, b_out):
    x = jnp.mean(features.astype(jnp.float32), axis=1)
    x = jnp.tanh(x @ w_dense.astype(jnp.float32) + b_dense.astype(jnp.float32))
    return x @ w_out.astype(jnp.float32) + b_out.astype(jnp.float32)


if __name__ == "__main__":
    # config: hidden_size=32, num_labels=4; inputs: batch=2, seq=8
    B, S, H, L = 2, 8, 32, 4

    key = jax.random.PRNGKey(0)
    k_feat, k_w1, k_b1, k_w2, k_b2 = jax.random.split(key, 5)

    features = jax.random.normal(k_feat, (B, S, H), dtype=jnp.float32)
    # deterministic synthetic params (matching nn.Linear shapes, stored [in, out])
    w_dense = jax.random.normal(k_w1, (H, H), dtype=jnp.float32) * 0.05
    b_dense = jax.random.normal(k_b1, (H,), dtype=jnp.float32) * 0.05
    w_out = jax.random.normal(k_w2, (H, L), dtype=jnp.float32) * 0.05
    b_out = jax.random.normal(k_b2, (L,), dtype=jnp.float32) * 0.05

    out = t5_avg_pool_head(features, w_dense, b_dense, w_out, b_out)
    out = jax.block_until_ready(out)

    ref = reference(features, w_dense, b_dense, w_out, b_out)
    assert out.shape == (B, L)
    assert jnp.allclose(out, ref, atol=1e-5, rtol=1e-5), "mismatch vs reference"

    print("KERNEL_OK")
</pallas_src>

<mosaic_0001>
module attributes {stable_mosaic.version = 11 : i64} {
  func.func @_head_kernel(%arg0: i32, %arg1: i32, %arg2: memref<2x8x32xf32, #tpu.memory_space<vmem>>, %arg3: memref<32x32xf32, #tpu.memory_space<vmem>>, %arg4: memref<1x32xf32, #tpu.memory_space<vmem>>, %arg5: memref<32x4xf32, #tpu.memory_space<vmem>>, %arg6: memref<1x4xf32, #tpu.memory_space<vmem>>, %arg7: memref<2x4xf32, #tpu.memory_space<vmem>>, %arg8: memref<2x32xf32, #tpu.memory_space<vmem>>) attributes {dimension_semantics = [#tpu.dimension_semantics<parallel>, #tpu.dimension_semantics<arbitrary>], iteration_bounds = array<i64: 1, 1>, scalar_prefetch = 0 : i64, scratch_operands = 1 : i64, tpu.core_type = #tpu.core_type<tc>, window_params = [{transform_indices = @transform_0, window_bounds = array<i64: 2, 8, 32>}, {pipeline_mode = #tpu.pipeline_mode<synchronous>, transform_indices = @transform_1, window_bounds = array<i64: 32, 32>}, {pipeline_mode = #tpu.pipeline_mode<synchronous>, transform_indices = @transform_2, window_bounds = array<i64: 1, 32>}, {pipeline_mode = #tpu.pipeline_mode<synchronous>, transform_indices = @transform_3, window_bounds = array<i64: 32, 4>}, {pipeline_mode = #tpu.pipeline_mode<synchronous>, transform_indices = @transform_4, window_bounds = array<i64: 1, 4>}, {transform_indices = @transform_5, window_bounds = array<i64: 2, 4>}]} {
    %c0_i32 = arith.constant 0 : i32
    %0 = arith.cmpi eq, %arg1, %c0_i32 : i32
    %1 = arith.extui %0 : i1 to i32
    %c0_i32_0 = arith.constant 0 : i32
    %2 = arith.cmpi ne, %1, %c0_i32_0 : i32
    scf.if %2 {
      %cst_9 = arith.constant 0.000000e+00 : f32
      %11 = vector.broadcast %cst_9 : f32 to vector<2x32xf32>
      %c0_10 = arith.constant 0 : index
      %c0_11 = arith.constant 0 : index
      %12 = vector.load %arg8[%c0_10, %c0_11] : memref<2x32xf32, #tpu.memory_space<vmem>>, vector<2x32xf32>
      tpu.vector_store %arg8[%c0_10, %c0_11], %11 {strides = array<i32>} : memref<2x32xf32, #tpu.memory_space<vmem>>, vector<2x32xf32>,
    } else {
    }
    %c0 = arith.constant 0 : index
    %c0_1 = arith.constant 0 : index
    %c0_2 = arith.constant 0 : index
    %3 = vector.load %arg2[%c0, %c0_1, %c0_2] : memref<2x8x32xf32, #tpu.memory_space<vmem>>, vector<2x8x32xf32>
    %cst = arith.constant dense<0.000000e+00> : vector<2x32xf32>
    %4 = vector.multi_reduction <add>, %3, %cst [1] : vector<2x8x32xf32> to vector<2x32xf32>
    %c0_3 = arith.constant 0 : index
    %c0_4 = arith.constant 0 : index
    %5 = vector.load %arg8[%c0_3, %c0_4] : memref<2x32xf32, #tpu.memory_space<vmem>>, vector<2x32xf32>
    %6 = arith.addf %5, %4 : vector<2x32xf32>
    %c0_5 = arith.constant 0 : index
    %c0_6 = arith.constant 0 : index
    %7 = vector.load %arg8[%c0_5, %c0_6] : memref<2x32xf32, #tpu.memory_space<vmem>>, vector<2x32xf32>
    tpu.vector_store %arg8[%c0_5, %c0_6], %6 {strides = array<i32>} : memref<2x32xf32, #tpu.memory_space<vmem>>, vector<2x32xf32>,
    %c0_i32_7 = arith.constant 0 : i32
    %8 = arith.cmpi eq, %arg1, %c0_i32_7 : i32
    %9 = arith.extui %8 : i1 to i32
    %c0_i32_8 = arith.constant 0 : i32
    %10 = arith.cmpi ne, %9, %c0_i32_8 : i32
    scf.if %10 {
      %c0_9 = arith.constant 0 : index
      %c0_10 = arith.constant 0 : index
      %11 = vector.load %arg8[%c0_9, %c0_10] : memref<2x32xf32, #tpu.memory_space<vmem>>, vector<2x32xf32>
      %cst_11 = arith.constant 1.250000e-01 : f32
      %12 = vector.broadcast %cst_11 : f32 to vector<2x32xf32>
      %13 = arith.mulf %11, %12 : vector<2x32xf32>
      %c0_12 = arith.constant 0 : index
      %c0_13 = arith.constant 0 : index
      %14 = vector.load %arg3[%c0_12, %c0_13] : memref<32x32xf32, #tpu.memory_space<vmem>>, vector<32x32xf32>
      %cst_14 = arith.constant dense<0.000000e+00> : vector<2x32xf32>
      %15 = tpu.matmul %13, %14, %cst_14 {dimension_numbers = #tpu.dot_dimension_numbers<[1], [0], [0], [1], [0, 0, 1, 1], [], []>} : vector<2x32xf32>, vector<32x32xf32>, vector<2x32xf32> -> vector<2x32xf32>
      %c0_15 = arith.constant 0 : index
      %c0_16 = arith.constant 0 : index
      %16 = vector.load %arg4[%c0_15, %c0_16] : memref<1x32xf32, #tpu.memory_space<vmem>>, vector<1x32xf32>
      %17 = vector.broadcast %16 : vector<1x32xf32> to vector<2x32xf32>
      %18 = arith.addf %15, %17 : vector<2x32xf32>
      %19 = math.tanh %18 : vector<2x32xf32>
      %c0_17 = arith.constant 0 : index
      %c0_18 = arith.constant 0 : index
      %20 = vector.load %arg5[%c0_17, %c0_18] : memref<32x4xf32, #tpu.memory_space<vmem>>, vector<32x4xf32>
      %cst_19 = arith.constant dense<0.000000e+00> : vector<2x4xf32>
      %21 = tpu.matmul %19, %20, %cst_19 {dimension_numbers = #tpu.dot_dimension_numbers<[1], [0], [0], [1], [0, 0, 1, 1], [], []>} : vector<2x32xf32>, vector<32x4xf32>, vector<2x4xf32> -> vector<2x4xf32>
      %c0_20 = arith.constant 0 : index
      %c0_21 = arith.constant 0 : index
      %22 = vector.load %arg6[%c0_20, %c0_21] : memref<1x4xf32, #tpu.memory_space<vmem>>, vector<1x4xf32>
      %23 = vector.broadcast %22 : vector<1x4xf32> to vector<2x4xf32>
      %24 = arith.addf %21, %23 : vector<2x4xf32>
      %c0_22 = arith.constant 0 : index
      %c0_23 = arith.constant 0 : index
      %25 = vector.load %arg7[%c0_22, %c0_23] : memref<2x4xf32, #tpu.memory_space<vmem>>, vector<2x4xf32>
      tpu.vector_store %arg7[%c0_22, %c0_23], %24 {strides = array<i32>} : memref<2x4xf32, #tpu.memory_space<vmem>>, vector<2x4xf32>,
    } else {
    }
    return
  }
  func.func @transform_0(%arg0: i32, %arg1: i32) -> (i32, i32, i32) {
    %c0_i32 = arith.constant 0 : i32
    %c0_i32_0 = arith.constant 0 : i32
    return %arg0, %arg1, %c0_i32 : i32, i32, i32
  }
  func.func @transform_1(%arg0: i32, %arg1: i32) -> (i32, i32) {
    %c0_i32 = arith.constant 0 : i32
    %c0_i32_0 = arith.constant 0 : i32
    %c0_i32_1 = arith.constant 0 : i32
    return %c0_i32, %c0_i32_0 : i32, i32
  }
  func.func @transform_2(%arg0: i32, %arg1: i32) -> (i32, i32) {
    %c0_i32 = arith.constant 0 : i32
    %c0_i32_0 = arith.constant 0 : i32
    %c0_i32_1 = arith.constant 0 : i32
    return %c0_i32, %c0_i32_0 : i32, i32
  }
  func.func @transform_3(%arg0: i32, %arg1: i32) -> (i32, i32) {
    %c0_i32 = arith.constant 0 : i32
    %c0_i32_0 = arith.constant 0 : i32
    %c0_i32_1 = arith.constant 0 : i32
    return %c0_i32, %c0_i32_0 : i32, i32
  }
  func.func @transform_4(%arg0: i32, %arg1: i32) -> (i32, i32) {
    %c0_i32 = arith.constant 0 : i32
    %c0_i32_0 = arith.constant 0 : i32
    %c0_i32_1 = arith.constant 0 : i32
    return %c0_i32, %c0_i32_0 : i32, i32
  }
  func.func @transform_5(%arg0: i32, %arg1: i32) -> (i32, i32) {
    %c0_i32 = arith.constant 0 : i32
    %c0_i32_0 = arith.constant 0 : i32
    return %arg0, %c0_i32 : i32, i32
  }
}

</mosaic_0001>

<llo_original>
// kernel: tpu_custom_call.1
$region0: #{tpu_custom_call.1}
  #allocation0 [shape = 'u32[]', space=smem, size = 0x4, offset = 0x4, fixed_abs, tag = 'smem constant byte address 0x4 - core index']
  #allocation1 [shape = 'u32[144,128]{1,0:T(1,128)}', space=vmem, size = 0x12000, scoped, tag = 'internal scratch']
  #allocation2 [shape = 'f32[2,32]{1,0:T(2,128)}', space=vmem, size = 0x400, scoped, tag = 'scratch operand']
  %s0 = inlined_call_operand.hbm [shape: f32[2,8,32], index: 0, kind: input, shape index: {}]
  %s1 = inlined_call_operand.vmem [shape: f32[32,32], index: 1, kind: input, shape index: {}]
  %s2 = inlined_call_operand.vmem [shape: f32[1,32], index: 2, kind: input, shape index: {}]
  %s3 = inlined_call_operand.vmem [shape: f32[32,4], index: 3, kind: input, shape index: {}]
  %s4 = inlined_call_operand.vmem [shape: f32[1,4], index: 4, kind: input, shape index: {}]
  %s5 = inlined_call_operand.hbm [shape: f32[2,4], index: 5, kind: output, shape index: {}]
  %s6 = sld [smem:[#allocation0]]
  $region42: #{tpu_custom_call.1} parent=0
    _
  %s8 = ssub.s32 1, %s6
  %s9 = scalar_select 0, %s8, %s6
  $region1: #{tpu_custom_call.1} parent=0
    #allocation3 [shape = 'u8[8192]{0}', space=vmem, size = 0x2000, scoped, tag = 'input window, operand 0, single buffered']
    #allocation4 [shape = 's32[1]{0}', space=sflag, size = 0x4, scoped, tag = 'scoped memory for tpu_custom_call.1']
    #allocation5 [shape = 's32[1]{0}', space=sflag, size = 0x4, scoped, tag = 'scoped memory for tpu_custom_call.1']
    #allocation6 [shape = 'u8[1024]{0}', space=vmem, size = 0x400, scoped, tag = 'output window, operand 0, single buffered']
    %10 = vsyncpa [#allocation4], 0
    %11 = vsyncpa [#allocation5], 0
    // Predicated region
    $region2: #{tpu_custom_call.1} parent=1 // pred_check
      _
    $region3: #{tpu_custom_call.1} parent=1 // pred_check_branch
      %13 = sbr.rel (0) target = $region5
    $region4: #{tpu_custom_call.1} parent=1 // pred_region
      %s15 = ssub.s32 256, 256
      %16 = vsyncadd [#allocation4], %s15
      %s17 = sshll.u32 [#allocation3], 4
      %s18 = int_to_ptr.vmem [resolvable:$true] %s17
      %23 = dma.hbm_to_vmem [thread:$0]  %s0, 256, %s18, [#allocation4], 128, 128, 8
    $region5: #{tpu_custom_call.1} parent=1 // pred_fallthru
      _
    // Predicated region
    $region6: #{tpu_custom_call.1} parent=1 // pred_check
      _
    $region7: #{tpu_custom_call.1} parent=1 // pred_check_branch
      %25 = sbr.rel (0) target = $region9
    $region8: #{tpu_custom_call.1} parent=1 // pred_region
      _
    $region9: #{tpu_custom_call.1} parent=1 // pred_fallthru
      _
    // Predicated region
    $region10: #{tpu_custom_call.1} parent=1 // pred_check
      _
    $region11: #{tpu_custom_call.1} parent=1 // pred_check_branch
      %27 = sbr.rel (0) target = $region13
    $region12: #{tpu_custom_call.1} parent=1 // pred_region
      _
    $region13: #{tpu_custom_call.1} parent=1 // pred_fallthru
      _
    // Predicated region
    $region14: #{tpu_custom_call.1} parent=1 // pred_check
      _
    $region15: #{tpu_custom_call.1} parent=1 // pred_check_branch
      %29 = sbr.rel (0) target = $region17
    $region16: #{tpu_custom_call.1} parent=1 // pred_region
      _
    $region17: #{tpu_custom_call.1} parent=1 // pred_fallthru
      _
    // Predicated region
    $region18: #{tpu_custom_call.1} parent=1 // pred_check
      _
    $region19: #{tpu_custom_call.1} parent=1 // pred_check_branch
      %31 = sbr.rel (0) target = $region21
    $region20: #{tpu_custom_call.1} parent=1 // pred_region
      _
    $region21: #{tpu_custom_call.1} parent=1 // pred_fallthru
      _
    // Predicated region
    $region22: #{tpu_custom_call.1} parent=1 // pred_check
      _
    $region23: #{tpu_custom_call.1} parent=1 // pred_check_branch
      %33 = sbr.rel (0) target = $region25
    $region24: #{tpu_custom_call.1} parent=1 // pred_region
      %34 = dma.done [#allocation4], 256
    $region25: #{tpu_custom_call.1} parent=1 // pred_fallthru
      _
    %p35 = scmp.eq.s32.totalorder 0, 0
    // Predicated region
    $region26: #{tpu_custom_call.1} parent=1 // pred_check
      %p36 = pneg %p35
    $region27: #{tpu_custom_call.1} parent=1 // pred_check_branch
      %38 = sbr.rel (%p36) target = $region29
    $region28: #{tpu_custom_call.1} parent=1 // pred_region
      %vm39 = vcmask 254976
      %40 = vst.msk [vmem:[#allocation2] sm:$0x3] %vm39, 0.0
    $region29: #{tpu_custom_call.1} parent=1 // pred_fallthru
      _
    %v41 = vld [vmem:[#allocation3] sm:$0xff]
    %v42 = vld [vmem:[#allocation3 + $0x8] sm:$0xff]
    %vm43 = vcmask 261120
    %v44 = vsel %vm43, %v41, 0.0
    %v45 = vrot.slane %v44, 4
    %v46 = vadd.f32 %v44, %v45
    %v47 = vrot.slane %v46, 2
    %v48 = vadd.f32 %v46, %v47
    %v49 = vrot.slane %v48, 1
    %v50 = vadd.f32 %v48, %v49
    %v51 = vsel %vm43, %v42, 0.0
    %v52 = vrot.slane %v51, 4
    %v53 = vadd.f32 %v51, %v52
    %v54 = vrot.slane %v53, 2
    %v55 = vadd.f32 %v53, %v54
    %v56 = vrot.slane %v55, 1
    %v57 = vadd.f32 %v55, %v56
    %v58 = vld [vmem:[#allocation2] sm:$0x3]
    %vm61 = vcmask 1041409
    %v62 = vsel %vm61, %v57, %v50
    %v64 = vadd.f32 %v58, %v62
    %vm65 = vcmask 254976
    %66 = vst.msk [vmem:[#allocation2] sm:$0x3] %vm65, %v64
    // Predicated region
    $region30: #{tpu_custom_call.1} parent=1 // pred_check
      %p67 = pneg %p35
    $region31: #{tpu_custom_call.1} parent=1 // pred_check_branch
      %69 = sbr.rel (%p67) target = $region33
    $region32: #{tpu_custom_call.1} parent=1 // pred_region
      %v70 = vld [vmem:[#allocation2] sm:$0x3]
      %v71 = vmul.f32 %v70, 0.125
      %v72 = vld [vmem:[%s1] sm:$0xff]
      %v73 = vld [vmem:[%s1 + $0x8] sm:$0xff]
      %v74 = vld [vmem:[%s1 + $0x10] sm:$0xff]
      %v75 = vld [vmem:[%s1 + $0x18] sm:$0xff]
      %v76 = vld [vmem:[%s2] sm:$0x1]
      %v78 = vlaneseq
      %v79 = vshrl.u32 %v78, 7
      %v80 = vsub.s32 0, %v79
      %v81 = vrot.slane %v76, %v80
      %v84 = vsel %vm43, %v71, 0
      %86 = vmatprep.subr.mxu0 0.0
      %87 = vmatpush1.msra.mxu0 0.0
      %88 = vmatprep.subr.mxu0 0.0
      %89 = vmatpush1.msra.mxu0 0.0
      %90 = vmatprep.subr.mxu0 0.0
      %91 = vmatpush1.msra.mxu0 0.0
      %92 = vmatprep.subr.mxu0 0.0
      %93 = vmatpush1.msra.mxu0 0.0
      %94 = vmatprep.subr.mxu0 0.0
      %95 = vmatpush1.msra.mxu0 0.0
      %96 = vmatprep.subr.mxu0 0.0
      %97 = vmatpush1.msra.mxu0 0.0
      %98 = vmatprep.subr.mxu0 0.0
      %99 = vmatpush1.msra.mxu0 0.0
      %100 = vmatprep.subr.mxu0 0.0
      %101 = vmatpush1.msra.mxu0 0.0
      %102 = vmatprep.subr.mxu0 0.0
      %103 = vmatpush1.msra.mxu0 0.0
      %104 = vmatprep.subr.mxu0 0.0
      %105 = vmatpush1.msra.mxu0 0.0
      %106 = vmatprep.subr.mxu0 0.0
      %107 = vmatpush1.msra.mxu0 0.0
      %108 = vmatprep.subr.mxu0 0.0
      %109 = vmatpush1.msra.mxu0 0.0
      %110 = vmatprep.subr.mxu0 0.0
      %111 = vmatpush1.msra.mxu0 %v75
      %112 = vmatprep.subr.mxu0 0.0
      %113 = vmatpush1.msra.mxu0 %v74
      %114 = vmatprep.subr.mxu0 0.0
      %115 = vmatpush1.msra.mxu0 %v73
      %116 = vmatprep.subr.mxu0 0.0
      %117 = vmatpush1.msra.mxu0 %v72
      %118 = vmatprep.subr.mxu0 0.0
      %119 = vmatpush2.msra.mxu0 0.0
      %120 = vmatprep.subr.mxu0 0.0
      %121 = vmatpush2.msra.mxu0 0.0
      %122 = vmatprep.subr.mxu0 0.0
      %123 = vmatpush2.msra.mxu0 0.0
      %124 = vmatprep.subr.mxu0 0.0
      %125 = vmatpush2.msra.mxu0 0.0
      %126 = vmatprep.subr.mxu0 0.0
      %127 = vmatpush2.msra.mxu0 0.0
      %128 = vmatprep.subr.mxu0 0.0
      %129 = vmatpush2.msra.mxu0 0.0
      %130 = vmatprep.subr.mxu0 0.0
      %131 = vmatpush2.msra.mxu0 0.0
      %132 = vmatprep.subr.mxu0 0.0
      %133 = vmatpush2.msra.mxu0 0.0
      %134 = vmatprep.subr.mxu0 0.0
      %135 = vmatpush2.msra.mxu0 0.0
      %136 = vmatprep.subr.mxu0 0.0
      %137 = vmatpush2.msra.mxu0 0.0
      %138 = vmatprep.subr.mxu0 0.0
      %139 = vmatpush2.msra.mxu0 0.0
      %140 = vmatprep.subr.mxu0 0.0
      %141 = vmatpush2.msra.mxu0 0.0
      %142 = vmatprep.subr.mxu0 0.0
      %143 = vmatpush2.msra.mxu0 0.0
      %144 = vmatprep.subr.mxu0 0.0
      %145 = vmatpush2.msra.mxu0 0.0
      %146 = vmatprep.subr.mxu0 0.0
      %147 = vmatpush2.msra.mxu0 0.0
      %148 = vmatprep.subr.mxu0 0.0
      %149 = vmatpush2.msra.mxu0 0.0
      %150 = vmatprep.mubr.f32.mxu0 0.0
      %151 = vmatmul.mubr.f32.gmra.mxu0 %v84
      %v152 = vpop.f32.mrf.mxu0
      %v153 = vadd.f32 %v81, %v152
      %v154 = vpop.f32.mrf.mxu0
      %155 = vdwg.mxu0
      %v156 = vtanh.pop %v153
      %v157 = vld [vmem:[%s3] sm:$0xff]
      %v158 = vld [vmem:[%s3 + $0x8] sm:$0xff]
      %v159 = vld [vmem:[%s3 + $0x10] sm:$0xff]
      %v160 = vld [vmem:[%s3 + $0x18] sm:$0xff]
      %v161 = vld [vmem:[%s4] sm:$0x1]
      %v163 = vlaneseq
      %v164 = vshrl.u32 %v163, 7
      %v165 = vsub.s32 0, %v164
      %v166 = vrot.slane %v161, %v165
      %v169 = vsel %vm43, %v156, 0
      %171 = vmatprep.subr.mxu0 0.0
      %172 = vmatpush1.msra.mxu0 0.0
      %173 = vmatprep.subr.mxu0 0.0
      %174 = vmatpush1.msra.mxu0 0.0
      %175 = vmatprep.subr.mxu0 0.0
      %176 = vmatpush1.msra.mxu0 0.0
      %177 = vmatprep.subr.mxu0 0.0
      %178 = vmatpush1.msra.mxu0 0.0
      %179 = vmatprep.subr.mxu0 0.0
      %180 = vmatpush1.msra.mxu0 0.0
      %181 = vmatprep.subr.mxu0 0.0
      %182 = vmatpush1.msra.mxu0 0.0
      %183 = vmatprep.subr.mxu0 0.0
      %184 = vmatpush1.msra.mxu0 0.0
      %185 = vmatprep.subr.mxu0 0.0
      %186 = vmatpush1.msra.mxu0 0.0
      %187 = vmatprep.subr.mxu0 0.0
      %188 = vmatpush1.msra.mxu0 0.0
      %189 = vmatprep.subr.mxu0 0.0
      %190 = vmatpush1.msra.mxu0 0.0
      %191 = vmatprep.subr.mxu0 0.0
      %192 = vmatpush1.msra.mxu0 0.0
      %193 = vmatprep.subr.mxu0 0.0
      %194 = vmatpush1.msra.mxu0 0.0
      %195 = vmatprep.subr.mxu0 0.0
      %196 = vmatpush1.msra.mxu0 %v160
      %197 = vmatprep.subr.mxu0 0.0
      %198 = vmatpush1.msra.mxu0 %v159
      %199 = vmatprep.subr.mxu0 0.0
      %200 = vmatpush1.msra.mxu0 %v158
      %201 = vmatprep.subr.mxu0 0.0
      %202 = vmatpush1.msra.mxu0 %v157
      %203 = vmatprep.subr.mxu0 0.0
      %204 = vmatpush2.msra.mxu0 0.0
      %205 = vmatprep.subr.mxu0 0.0
      %206 = vmatpush2.msra.mxu0 0.0
      %207 = vmatprep.subr.mxu0 0.0
      %208 = vmatpush2.msra.mxu0 0.0
      %209 = vmatprep.subr.mxu0 0.0
      %210 = vmatpush2.msra.mxu0 0.0
      %211 = vmatprep.subr.mxu0 0.0
      %212 = vmatpush2.msra.mxu0 0.0
      %213 = vmatprep.subr.mxu0 0.0
      %214 = vmatpush2.msra.mxu0 0.0
      %215 = vmatprep.subr.mxu0 0.0
      %216 = vmatpush2.msra.mxu0 0.0
      %217 = vmatprep.subr.mxu0 0.0
      %218 = vmatpush2.msra.mxu0 0.0
      %219 = vmatprep.subr.mxu0 0.0
      %220 = vmatpush2.msra.mxu0 0.0
      %221 = vmatprep.subr.mxu0 0.0
      %222 = vmatpush2.msra.mxu0 0.0
      %223 = vmatprep.subr.mxu0 0.0
      %224 = vmatpush2.msra.mxu0 0.0
      %225 = vmatprep.subr.mxu0 0.0
      %226 = vmatpush2.msra.mxu0 0.0
      %227 = vmatprep.subr.mxu0 0.0
      %228 = vmatpush2.msra.mxu0 0.0
      %229 = vmatprep.subr.mxu0 0.0
      %230 = vmatpush2.msra.mxu0 0.0
      %231 = vmatprep.subr.mxu0 0.0
      %232 = vmatpush2.msra.mxu0 0.0
      %233 = vmatprep.subr.mxu0 0.0
      %234 = vmatpush2.msra.mxu0 0.0
      %235 = vmatprep.mubr.f32.mxu0 0.0
      %236 = vmatmul.mubr.f32.gmra.mxu0 %v169
      %v237 = vpop.f32.mrf.mxu0
      %v238 = vadd.f32 %v166, %v237
      %v239 = vpop.f32.mrf.mxu0
      %240 = vdwg.mxu0
      %vm241 = vcmask 25600
      %242 = vst.msk [vmem:[#allocation6] sm:$0x3] %vm241, %v238
    $region33: #{tpu_custom_call.1} parent=1 // pred_fallthru
      _
    // Predicated region
    $region34: #{tpu_custom_call.1} parent=1 // pred_check
      _
    $region35: #{tpu_custom_call.1} parent=1 // pred_check_branch
      %244 = sbr.rel (0) target = $region37
    $region36: #{tpu_custom_call.1} parent=1 // pred_region
      %s246 = ssub.s32 32, 32
      %247 = vsyncadd [#allocation5], %s246
      %s249 = sshll.u32 [#allocation6], 4
      %s250 = int_to_ptr.vmem [resolvable:$true] %s249
      %252 = dma.vmem_to_hbm [thread:$0]  %s250, 32, %s5, [#allocation5]
    $region37: #{tpu_custom_call.1} parent=1 // pred_fallthru
      _
    // Predicated region
    $region38: #{tpu_custom_call.1} parent=1 // pred_check
      _
    $region39: #{tpu_custom_call.1} parent=1 // pred_check_branch
      %254 = sbr.rel (0) target = $region41
    $region40: #{tpu_custom_call.1} parent=1 // pred_region
      %255 = dma.done [#allocation5], 32
    $region41: #{tpu_custom_call.1} parent=1 // pred_fallthru
      _
    %256 = vsyncpa [#allocation4], 1
    %257 = vsyncpa [#allocation5], 1

</llo_original>
